<compile_context>
chip_gen: v7x
topology: tpu7x:2x2x1
jax: 0.10.0
libtpu: 0.0.40
codegen_flags: <defaults>
</compile_context>

<pallas_src>
import math
import functools

import numpy as np
import jax
import jax.numpy as jnp
from jax.experimental import pallas as pl
from jax.experimental.pallas import tpu as pltpu


# ----------------------------------------------------------------------------
# sincos positional embedding (numpy, same as reference)
# ----------------------------------------------------------------------------
def get_1d_sincos_pos_embed_from_grid(embed_dim, pos):
    assert embed_dim % 2 == 0
    omega = np.arange(embed_dim // 2, dtype=np.float64)
    omega /= embed_dim / 2.0
    omega = 1.0 / 10000 ** omega
    pos = pos.reshape(-1)
    out = np.einsum('m,d->md', pos, omega)
    emb_sin = np.sin(out)
    emb_cos = np.cos(out)
    return np.concatenate([emb_sin, emb_cos], axis=1)


def get_2d_sincos_pos_embed_from_grid(embed_dim, grid):
    assert embed_dim % 2 == 0
    emb_h = get_1d_sincos_pos_embed_from_grid(embed_dim // 2, grid[0])
    emb_w = get_1d_sincos_pos_embed_from_grid(embed_dim // 2, grid[1])
    return np.concatenate([emb_h, emb_w], axis=1)


def get_2d_sincos_pos_embed(embed_dim, grid_size):
    grid_h = np.arange(grid_size, dtype=np.float32)
    grid_w = np.arange(grid_size, dtype=np.float32)
    grid = np.meshgrid(grid_w, grid_h)
    grid = np.stack(grid, axis=0)
    grid = grid.reshape([2, 1, grid_size, grid_size])
    return get_2d_sincos_pos_embed_from_grid(embed_dim, grid)


# ----------------------------------------------------------------------------
# shared helpers
# ----------------------------------------------------------------------------
def _layernorm(v, eps=1e-6):
    mu = jnp.mean(v, axis=-1, keepdims=True)
    d = v - mu
    var = jnp.mean(d * d, axis=-1, keepdims=True)
    return d * jax.lax.rsqrt(var + eps)


def _vmem_limit_bytes(frac=0.85):
    # Re-derive the VMEM budget per generation: ~54 MiB on v7x (64 MiB/TC),
    # ~108 MiB on v5e/v6e (128 MiB).
    try:
        cap = pltpu.get_tpu_info().vmem_capacity_bytes
    except Exception:
        cap = 64 * 1024 * 1024
    return int(cap * frac)


# ----------------------------------------------------------------------------
# Patch-embedding kernel: (patches @ W + b) + pos_embed, tiled over batch
# ----------------------------------------------------------------------------
def _patch_embed_kernel(x_ref, w_ref, b_ref, pos_ref, o_ref):
    be, T, K = x_ref.shape
    D = o_ref.shape[-1]
    h = (jnp.dot(x_ref[...].reshape(be * T, K), w_ref[...],
                 preferred_element_type=jnp.float32) + b_ref[...])
    o_ref[...] = h.reshape(be, T, D) + pos_ref[...]


def patch_embed(patches, w, b, pos, *, be=8):
    # patches: (B, T, K) bf16; w: (K, D) bf16; b: (1, D) f32; pos: (1, T, D) f32
    B, T, K = patches.shape
    D = w.shape[1]
    be = max(1, min(be, B))
    Bp = ((B + be - 1) // be) * be
    if Bp != B:
        patches = jnp.pad(patches, ((0, Bp - B), (0, 0), (0, 0)))
    out = pl.pallas_call(
        _patch_embed_kernel,
        grid=(Bp // be,),
        in_specs=[
            pl.BlockSpec((be, T, K), lambda i: (i, 0, 0)),
            pl.BlockSpec((K, D), lambda i: (0, 0)),
            pl.BlockSpec((1, D), lambda i: (0, 0)),
            pl.BlockSpec((1, T, D), lambda i: (0, 0, 0)),
        ],
        out_specs=pl.BlockSpec((be, T, D), lambda i: (i, 0, 0)),
        out_shape=jax.ShapeDtypeStruct((Bp, T, D), jnp.float32),
        compiler_params=pltpu.CompilerParams(dimension_semantics=("parallel",)),
    )(patches, w, b, pos)
    return out[:B]


# ----------------------------------------------------------------------------
# Fused ViT blocks kernel: grid = (B//Bt, depth), weights stacked over depth.
# Residual stream lives in a VMEM scratch; only the class token is emitted.
# ----------------------------------------------------------------------------
def _vit_blocks_kernel(x_ref, wqkv_ref, wo_ref, w1_ref, w2_ref, bias_ref,
                       o_ref, acc_ref, *, num_heads, valid_t):
    l = pl.program_id(1)

    @pl.when(l == 0)
    def _():
        acc_ref[...] = x_ref[...]

    bt, T, D = acc_ref.shape
    H = num_heads
    hd = D // H
    Dm = w1_ref.shape[-1]
    scale = 1.0 / math.sqrt(hd)

    x = acc_ref[...].reshape(bt * T, D)          # f32 residual stream (rows = tokens)

    biases = bias_ref[0]                          # (1, 3D + D + Dm + D) f32
    b_qkv = biases[:, 0:3 * D]
    b_o = biases[:, 3 * D:4 * D]
    b_1 = biases[:, 4 * D:4 * D + Dm]
    b_2 = biases[:, 4 * D + Dm:]

    # --- attention branch (pre-LN), fused QKV matmul -----------------------
    h = _layernorm(x).astype(jnp.bfloat16)
    qkv = jnp.dot(h, wqkv_ref[0], preferred_element_type=jnp.float32) + b_qkv
    q = qkv[:, 0:D] * scale
    k = qkv[:, D:2 * D]
    v = qkv[:, 2 * D:3 * D]

    def heads(t):
        # (bt*T, D) f32 -> (H*bt, T, hd) bf16; batch index = h*bt + b.
        # Only contiguous reshapes + a 3-D leading-dim transpose (no 4-D perms).
        return (t.astype(jnp.bfloat16)
                 .reshape(bt * T, H, hd)
                 .transpose(1, 0, 2)
                 .reshape(H * bt, T, hd))

    qh, kh, vh = heads(q), heads(k), heads(v)

    s = jnp.einsum('bqd,bkd->bqk', qh, kh,
                   preferred_element_type=jnp.float32)      # (H*bt, T, T) f32
    if valid_t < T:
        key_idx = jax.lax.broadcasted_iota(jnp.int32, (1, 1, T), 2)
        s = jnp.where(key_idx < valid_t, s, -1e30)          # mask padded keys (f32!)
    s = s - jnp.max(s, axis=-1, keepdims=True)
    p = jnp.exp(s)
    p = p * pl.reciprocal(jnp.sum(p, axis=-1, keepdims=True), approx=True)
    o = jnp.einsum('bqk,bkd->bqd', p.astype(jnp.bfloat16), vh,
                   preferred_element_type=jnp.float32)      # (H*bt, T, hd)
    attn = (o.reshape(H, bt * T, hd).transpose(1, 0, 2).reshape(bt * T, D))
    attn = (jnp.dot(attn.astype(jnp.bfloat16), wo_ref[0],
                    preferred_element_type=jnp.float32) + b_o)
    x = x + attn

    # --- MLP branch (pre-LN) ------------------------------------------------
    h = _layernorm(x).astype(jnp.bfloat16)
    h1 = jnp.dot(h, w1_ref[0], preferred_element_type=jnp.float32) + b_1
    h1 = jax.nn.gelu(h1, approximate=True).astype(jnp.bfloat16)   # GELU(tanh)
    x = x + (jnp.dot(h1, w2_ref[0], preferred_element_type=jnp.float32) + b_2)

    acc_ref[...] = x.reshape(bt, T, D)

    @pl.when(l == pl.num_programs(1) - 1)
    def _():
        o_ref[...] = acc_ref[:, 0:1, :]          # only the class/output token


def vit_blocks(x, stacked, num_heads, valid_t, *, bt=8, vmem_limit=None):
    # x: (B, T, D) f32 (T already padded to a multiple of 8).
    # Returns (B, D) f32: the class/output token after all blocks.
    # Bt tuning: ~4-8 on v5e, ~8-16 on v6e, ~4-6 on v7x (64 MiB VMEM).
    B, T, D = x.shape
    L = stacked['wqkv'].shape[0]
    bt = max(1, min(bt, B))
    Bp = ((B + bt - 1) // bt) * bt
    if Bp != B:
        x = jnp.pad(x, ((0, Bp - B), (0, 0), (0, 0)))
    nb = Bp // bt

    kernel = functools.partial(_vit_blocks_kernel,
                               num_heads=num_heads, valid_t=valid_t)

    def wspec(a):   # stacked weight/bias: block = one layer, index = depth step
        return pl.BlockSpec((1,) + a.shape[1:], lambda b, l: (l, 0, 0))

    if vmem_limit is None:
        vmem_limit = _vmem_limit_bytes()

    out = pl.pallas_call(
        kernel,
        grid=(nb, L),
        in_specs=[
            pl.BlockSpec((bt, T, D), lambda b, l: (b, 0, 0)),
            wspec(stacked['wqkv']), wspec(stacked['wo']),
            wspec(stacked['w1']), wspec(stacked['w2']),
            wspec(stacked['bias']),
        ],
        out_specs=pl.BlockSpec((bt, 1, D), lambda b, l: (b, 0, 0)),
        out_shape=jax.ShapeDtypeStruct((Bp, 1, D), jnp.float32),
        scratch_shapes=[pltpu.VMEM((bt, T, D), jnp.float32)],
        compiler_params=pltpu.CompilerParams(
            dimension_semantics=("parallel", "arbitrary"),
            vmem_limit_bytes=vmem_limit,
        ),
    )(x, stacked['wqkv'], stacked['wo'], stacked['w1'], stacked['w2'],
      stacked['bias'])
    return out[:B, 0]


# ----------------------------------------------------------------------------
# Final layer kernel: LN + Linear on the class/output token
# ----------------------------------------------------------------------------
def _final_kernel(x_ref, w_ref, b_ref, o_ref):
    h = _layernorm(x_ref[...]).astype(jnp.bfloat16)
    o_ref[...] = (
        jnp.dot(h, w_ref[...], preferred_element_type=jnp.float32) + b_ref[...]
    )


def final_layer(x, w, b):
    B, D = x.shape
    N = w.shape[1]
    return pl.pallas_call(
        _final_kernel,
        out_shape=jax.ShapeDtypeStruct((B, N), jnp.float32),
    )(x, w, b)


# ----------------------------------------------------------------------------
# Parameter construction (mirrors ViT.__init__ / initialize_weights)
# ----------------------------------------------------------------------------
def xavier_uniform(key, fan_out, fan_in):
    bound = math.sqrt(6.0 / (fan_in + fan_out))
    return jax.random.uniform(key, (fan_out, fan_in), minval=-bound,
                              maxval=bound, dtype=jnp.float32)


def init_vit_params(key, *, input_size, patch_size, in_channels,
                    hidden_size, depth, mlp_ratio):
    D = hidden_size
    K = in_channels * patch_size * patch_size
    Dm = int(D * mlp_ratio)
    grid_size = input_size // patch_size

    keys = jax.random.split(key, depth * 4 + 1)
    ki = iter(range(len(keys)))

    # patch embedding (Conv2d as flattened linear), xavier on (D, K), bias 0
    proj_w = xavier_uniform(keys[next(ki)], D, K).T.astype(jnp.bfloat16)  # (K, D)
    proj_b = jnp.zeros((1, D), jnp.float32)

    pos_embed = jnp.asarray(
        get_2d_sincos_pos_embed(D, grid_size), jnp.float32)[None]   # (1, T, D)
    out_embed = jnp.zeros((1, 1, D), jnp.float32)                   # zeros at init

    wqkv, wo, w1, w2 = [], [], [], []
    for _ in range(depth):
        wqkv.append(xavier_uniform(keys[next(ki)], 3 * D, D).T)     # (D, 3D)
        wo.append(xavier_uniform(keys[next(ki)], D, D).T)           # (D, D)
        w1.append(xavier_uniform(keys[next(ki)], Dm, D).T)          # (D, Dm)
        w2.append(xavier_uniform(keys[next(ki)], D, Dm).T)          # (Dm, D)

    blocks = {
        'wqkv': jnp.stack(wqkv).astype(jnp.bfloat16),
        'wo': jnp.stack(wo).astype(jnp.bfloat16),
        'w1': jnp.stack(w1).astype(jnp.bfloat16),
        'w2': jnp.stack(w2).astype(jnp.bfloat16),
        # packed biases, layout [qkv(3D) | o(D) | fc1(Dm) | fc2(D)];
        # all Linear biases are zero-initialized in the reference.
        'bias': jnp.zeros((depth, 1, 3 * D + D + Dm + D), jnp.float32),
    }

    # final layer: zero-initialized (per initialize_weights)
    final_w = jnp.zeros((D, D), jnp.bfloat16)
    final_b = jnp.zeros((1, D), jnp.float32)

    return {
        'proj_w': proj_w, 'proj_b': proj_b,
        'pos_embed': pos_embed, 'out_embed': out_embed,
        'blocks': blocks,
        'final_w': final_w, 'final_b': final_b,
    }


# ----------------------------------------------------------------------------
# ViT forward
# ----------------------------------------------------------------------------
def vit_forward(x, params, *, patch_size, num_heads, bt=8):
    B, C, H, W = x.shape
    p = patch_size
    gh, gw = H // p, W // p
    T = gh * gw
    D = params['pos_embed'].shape[-1]

    # patch extraction (glue): NCHW -> (B, T, C*p*p), per-patch order (C, ph, pw)
    patches = (x.reshape(B, C, gh, p, gw, p)
                 .transpose(0, 2, 4, 1, 3, 5)
                 .reshape(B, T, C * p * p)
                 .astype(jnp.bfloat16))

    # patch embed + pos-embed add fused in one kernel
    tok = patch_embed(patches, params['proj_w'], params['proj_b'],
                      params['pos_embed'], be=bt)                 # (B, T, D)

    out_tok = jnp.broadcast_to(params['out_embed'], (B, 1, D))
    xseq = jnp.concatenate([out_tok, tok], axis=1)                # (B, T+1, D)

    valid_t = T + 1
    Tp = ((valid_t + 7) // 8) * 8          # pad tokens to a sublane multiple
    if Tp != valid_t:
        xseq = jnp.pad(xseq, ((0, 0), (0, Tp - valid_t), (0, 0)))
    # TODO(synk): the out-token concat + pad above could also be folded into the
    # patch-embed kernel (kept as tiny XLA glue for lowering robustness).

    x0 = vit_blocks(xseq, params['blocks'], num_heads, valid_t, bt=bt)  # (B, D)
    return final_layer(x0, params['final_w'], params['final_b'])


# ----------------------------------------------------------------------------
# main
# ----------------------------------------------------------------------------
if __name__ == "__main__":
    # small shapes consistent with the module
    B, C, HW = 2, 4, 16
    patch_size = 2
    hidden_size = 32
    depth = 2
    num_heads = 4
    mlp_ratio = 4.0

    key = jax.random.PRNGKey(0)
    kx, kp = jax.random.split(key)
    x = jax.random.normal(kx, (B, C, HW, HW), dtype=jnp.float32)

    params = init_vit_params(
        kp, input_size=HW, patch_size=patch_size, in_channels=C,
        hidden_size=hidden_size, depth=depth, mlp_ratio=mlp_ratio)

    out = vit_forward(x, params, patch_size=patch_size, num_heads=num_heads,
                      bt=8)
    out = jax.block_until_ready(out)
    assert out.shape == (B, hidden_size)
    assert bool(jnp.all(jnp.isfinite(out)))
    print("KERNEL_OK")
</pallas_src>

<mosaic_0001>
module attributes {stable_mosaic.version = 11 : i64} {
  func.func @_patch_embed_kernel(%arg0: i32, %arg1: memref<2x64x16xbf16, #tpu.memory_space<vmem>>, %arg2: memref<16x32xbf16, #tpu.memory_space<vmem>>, %arg3: memref<1x32xf32, #tpu.memory_space<vmem>>, %arg4: memref<1x64x32xf32, #tpu.memory_space<vmem>>, %arg5: memref<2x64x32xf32, #tpu.memory_space<vmem>>) attributes {dimension_semantics = [#tpu.dimension_semantics<parallel>], iteration_bounds = array<i64: 1>, scalar_prefetch = 0 : i64, scratch_operands = 0 : i64, tpu.core_type = #tpu.core_type<tc>, window_params = [{transform_indices = @transform_0, window_bounds = array<i64: 2, 64, 16>}, {pipeline_mode = #tpu.pipeline_mode<synchronous>, transform_indices = @transform_1, window_bounds = array<i64: 16, 32>}, {pipeline_mode = #tpu.pipeline_mode<synchronous>, transform_indices = @transform_2, window_bounds = array<i64: 1, 32>}, {pipeline_mode = #tpu.pipeline_mode<synchronous>, transform_indices = @transform_3, window_bounds = array<i64: 1, 64, 32>}, {transform_indices = @transform_4, window_bounds = array<i64: 2, 64, 32>}]} {
    %c0 = arith.constant 0 : index
    %c0_0 = arith.constant 0 : index
    %c0_1 = arith.constant 0 : index
    %0 = vector.load %arg1[%c0, %c0_0, %c0_1] : memref<2x64x16xbf16, #tpu.memory_space<vmem>>, vector<2x64x16xbf16>
    %1 = vector.shape_cast %0 : vector<2x64x16xbf16> to vector<128x16xbf16>
    %c0_2 = arith.constant 0 : index
    %c0_3 = arith.constant 0 : index
    %2 = vector.load %arg2[%c0_2, %c0_3] : memref<16x32xbf16, #tpu.memory_space<vmem>>, vector<16x32xbf16>
    %cst = arith.constant dense<0.000000e+00> : vector<128x32xf32>
    %3 = tpu.matmul %1, %2, %cst {dimension_numbers = #tpu.dot_dimension_numbers<[1], [0], [0], [1], [0, 0, 1, 1], [], []>} : vector<128x16xbf16>, vector<16x32xbf16>, vector<128x32xf32> -> vector<128x32xf32>
    %c0_4 = arith.constant 0 : index
    %c0_5 = arith.constant 0 : index
    %4 = vector.load %arg3[%c0_4, %c0_5] : memref<1x32xf32, #tpu.memory_space<vmem>>, vector<1x32xf32>
    %5 = vector.broadcast %4 : vector<1x32xf32> to vector<128x32xf32>
    %6 = arith.addf %3, %5 : vector<128x32xf32>
    %7 = vector.shape_cast %6 : vector<128x32xf32> to vector<2x64x32xf32>
    %c0_6 = arith.constant 0 : index
    %c0_7 = arith.constant 0 : index
    %c0_8 = arith.constant 0 : index
    %8 = vector.load %arg4[%c0_6, %c0_7, %c0_8] : memref<1x64x32xf32, #tpu.memory_space<vmem>>, vector<1x64x32xf32>
    %9 = vector.broadcast %8 : vector<1x64x32xf32> to vector<2x64x32xf32>
    %10 = arith.addf %7, %9 : vector<2x64x32xf32>
    %c0_9 = arith.constant 0 : index
    %c0_10 = arith.constant 0 : index
    %c0_11 = arith.constant 0 : index
    %11 = vector.load %arg5[%c0_9, %c0_10, %c0_11] : memref<2x64x32xf32, #tpu.memory_space<vmem>>, vector<2x64x32xf32>
    tpu.vector_store %arg5[%c0_9, %c0_10, %c0_11], %10 {strides = array<i32>} : memref<2x64x32xf32, #tpu.memory_space<vmem>>, vector<2x64x32xf32>,
    return
  }
  func.func @transform_0(%arg0: i32) -> (i32, i32, i32) {
    %c0_i32 = arith.constant 0 : i32
    %c0_i32_0 = arith.constant 0 : i32
    %c0_i32_1 = arith.constant 0 : i32
    return %arg0, %c0_i32, %c0_i32_0 : i32, i32, i32
  }
  func.func @transform_1(%arg0: i32) -> (i32, i32) {
    %c0_i32 = arith.constant 0 : i32
    %c0_i32_0 = arith.constant 0 : i32
    %c0_i32_1 = arith.constant 0 : i32
    return %c0_i32, %c0_i32_0 : i32, i32
  }
  func.func @transform_2(%arg0: i32) -> (i32, i32) {
    %c0_i32 = arith.constant 0 : i32
    %c0_i32_0 = arith.constant 0 : i32
    %c0_i32_1 = arith.constant 0 : i32
    return %c0_i32, %c0_i32_0 : i32, i32
  }
  func.func @transform_3(%arg0: i32) -> (i32, i32, i32) {
    %c0_i32 = arith.constant 0 : i32
    %c0_i32_0 = arith.constant 0 : i32
    %c0_i32_1 = arith.constant 0 : i32
    %c0_i32_2 = arith.constant 0 : i32
    return %c0_i32, %c0_i32_0, %c0_i32_1 : i32, i32, i32
  }
  func.func @transform_4(%arg0: i32) -> (i32, i32, i32) {
    %c0_i32 = arith.constant 0 : i32
    %c0_i32_0 = arith.constant 0 : i32
    %c0_i32_1 = arith.constant 0 : i32
    return %arg0, %c0_i32, %c0_i32_0 : i32, i32, i32
  }
}

</mosaic_0001>

<llo_original>
// kernel: tpu_custom_call.1
$region0: #{tpu_custom_call.1}
  #allocation0 [shape = 'u32[]', space=smem, size = 0x4, offset = 0x4, fixed_abs, tag = 'smem constant byte address 0x4 - core index']
  #allocation1 [shape = 'u32[144,128]{1,0:T(1,128)}', space=vmem, size = 0x12000, scoped, tag = 'internal scratch']
  %s0 = inlined_call_operand.vmem [shape: bf16[2,64,16], index: 0, kind: input, shape index: {}]
  %s1 = inlined_call_operand.vmem [shape: bf16[16,32], index: 1, kind: input, shape index: {}]
  %s2 = inlined_call_operand.vmem [shape: f32[1,32], index: 2, kind: input, shape index: {}]
  %s3 = inlined_call_operand.vmem [shape: f32[1,64,32], index: 3, kind: input, shape index: {}]
  %s4 = inlined_call_operand.vmem [shape: f32[2,64,32], index: 4, kind: output, shape index: {}]
  %s5 = sld [smem:[#allocation0]]
  $region26: #{tpu_custom_call.1} parent=0
    _
  %s7 = ssub.s32 1, %s5
  %s8 = scalar_select 0, %s7, %s5
  // Predicated region
  $region2: #{tpu_custom_call.1} parent=0 // pred_check
    _
  $region3: #{tpu_custom_call.1} parent=0 // pred_check_branch
    %10 = sbr.rel (0) target = $region5
  $region4: #{tpu_custom_call.1} parent=0 // pred_region
    _
  $region5: #{tpu_custom_call.1} parent=0 // pred_fallthru
    _
  // Predicated region
  $region6: #{tpu_custom_call.1} parent=0 // pred_check
    _
  $region7: #{tpu_custom_call.1} parent=0 // pred_check_branch
    %12 = sbr.rel (0) target = $region9
  $region8: #{tpu_custom_call.1} parent=0 // pred_region
    _
  $region9: #{tpu_custom_call.1} parent=0 // pred_fallthru
    _
  // Predicated region
  $region10: #{tpu_custom_call.1} parent=0 // pred_check
    _
  $region11: #{tpu_custom_call.1} parent=0 // pred_check_branch
    %14 = sbr.rel (0) target = $region13
  $region12: #{tpu_custom_call.1} parent=0 // pred_region
    _
  $region13: #{tpu_custom_call.1} parent=0 // pred_fallthru
    _
  // Predicated region
  $region14: #{tpu_custom_call.1} parent=0 // pred_check
    _
  $region15: #{tpu_custom_call.1} parent=0 // pred_check_branch
    %16 = sbr.rel (0) target = $region17
  $region16: #{tpu_custom_call.1} parent=0 // pred_region
    _
  $region17: #{tpu_custom_call.1} parent=0 // pred_fallthru
    _
  %v18 = vld [vmem:[%s0] sm:$0xf]
  %v19 = vld [vmem:[%s0 + $0x4] sm:$0xf]
  %v20 = vld [vmem:[%s0 + $0x8] sm:$0xf]
  %v21 = vld [vmem:[%s0 + $0xc] sm:$0xf]
  %v22 = vld [vmem:[%s0 + $0x10] sm:$0xf]
  %v23 = vld [vmem:[%s0 + $0x14] sm:$0xf]
  %v24 = vld [vmem:[%s0 + $0x18] sm:$0xf]
  %v25 = vld [vmem:[%s0 + $0x1c] sm:$0xf]
  %v26 = vld [vmem:[%s0 + $0x20] sm:$0xf]
  %v27 = vld [vmem:[%s0 + $0x24] sm:$0xf]
  %v28 = vld [vmem:[%s0 + $0x28] sm:$0xf]
  %v29 = vld [vmem:[%s0 + $0x2c] sm:$0xf]
  %v30 = vld [vmem:[%s0 + $0x30] sm:$0xf]
  %v31 = vld [vmem:[%s0 + $0x34] sm:$0xf]
  %v32 = vld [vmem:[%s0 + $0x38] sm:$0xf]
  %v33 = vld [vmem:[%s0 + $0x3c] sm:$0xf]
  %v34 = vld [vmem:[%s1] sm:$0xf]
  %v35 = vld [vmem:[%s1 + $0x4] sm:$0xf]
  %v36 = vld [vmem:[%s2] sm:$0x1]
  %v38 = vlaneseq
  %v39 = vshrl.u32 %v38, 7
  %v40 = vsub.s32 0, %v39
  %v41 = vrot.slane %v36, %v40
  %v59 = vunpack.c.l.b16 %v18
  %v60 = vunpack.c.l.b16 %v19
  %v61 = vunpack.c.l.b16 %v20
  %v62 = vunpack.c.l.b16 %v21
  %v63 = vunpack.c.l.b16 %v22
  %v64 = vunpack.c.l.b16 %v23
  %v65 = vunpack.c.l.b16 %v24
  %v66 = vunpack.c.l.b16 %v25
  %v67 = vunpack.c.l.b16 %v26
  %v68 = vunpack.c.l.b16 %v27
  %v69 = vunpack.c.l.b16 %v28
  %v70 = vunpack.c.l.b16 %v29
  %v71 = vunpack.c.l.b16 %v30
  %v72 = vunpack.c.l.b16 %v31
  %v73 = vunpack.c.l.b16 %v32
  %v74 = vunpack.c.l.b16 %v33
  %v75 = vpack.c.b16 %v60, %v59
  %v76 = vpack.c.b16 %v62, %v61
  %v77 = vpack.c.b16 %v64, %v63
  %v78 = vpack.c.b16 %v66, %v65
  %v79 = vpack.c.b16 %v68, %v67
  %v80 = vpack.c.b16 %v70, %v69
  %v81 = vpack.c.b16 %v72, %v71
  %v82 = vpack.c.b16 %v74, %v73
  %v85 = vunpack.c.l.b16 %v34
  %v86 = vunpack.c.l.b16 %v35
  %v87 = vpack.c.b16 %v86, %v85
  %vm89 = vcmask 130048
  %v91 = vsel %vm89, %v75, 0
  %v94 = vsel %vm89, %v76, 0
  %v97 = vsel %vm89, %v77, 0
  %v100 = vsel %vm89, %v78, 0
  %v103 = vsel %vm89, %v79, 0
  %v106 = vsel %vm89, %v80, 0
  %v109 = vsel %vm89, %v81, 0
  %v112 = vsel %vm89, %v82, 0
  %114 = vmatprep.subr.bf16.mxu0 0
  %115 = vmatpush1.bf16.msra.mxu0 %v87
  %116 = vmatprep.subr.bf16.mxu0 0
  %117 = vmatpush1.bf16.msra.mxu0 0
  %118 = vmatprep.subr.bf16.mxu0 0
  %119 = vmatpush1.bf16.msra.mxu0 0
  %120 = vmatprep.subr.bf16.mxu0 0
  %121 = vmatpush1.bf16.msra.mxu0 0
  %122 = vmatprep.subr.bf16.mxu0 0
  %123 = vmatpush1.bf16.msra.mxu0 0
  %124 = vmatprep.subr.bf16.mxu0 0
  %125 = vmatpush1.bf16.msra.mxu0 0
  %126 = vmatprep.subr.bf16.mxu0 0
  %127 = vmatpush1.bf16.msra.mxu0 0
  %128 = vmatprep.subr.bf16.mxu0 0
  %129 = vmatpush1.bf16.msra.mxu0 0
  %130 = vmatprep.subr.bf16.mxu0 0
  %131 = vmatpush1.bf16.msra.mxu0 0
  %132 = vmatprep.subr.bf16.mxu0 0
  %133 = vmatpush1.bf16.msra.mxu0 0
  %134 = vmatprep.subr.bf16.mxu0 0
  %135 = vmatpush1.bf16.msra.mxu0 0
  %136 = vmatprep.subr.bf16.mxu0 0
  %137 = vmatpush1.bf16.msra.mxu0 0
  %138 = vmatprep.subr.bf16.mxu0 0
  %139 = vmatpush1.bf16.msra.mxu0 0
  %140 = vmatprep.subr.bf16.mxu0 0
  %141 = vmatpush1.bf16.msra.mxu0 0
  %142 = vmatprep.subr.bf16.mxu0 0
  %143 = vmatpush1.bf16.msra.mxu0 0
  %144 = vmatprep.subr.bf16.mxu0 0
  %145 = vmatpush1.bf16.msra.mxu0 0
  %146 = vmatprep.mubr.bf16.mxu0 0
  %147 = vmatmul.mubr.bf16.gmra.mrb[0].mxu0 %v91
  %v148 = vpop.f32.mrb[0].mxu0
  %v149 = vadd.f32 %v41, %v148
  %v150 = vpop.f32.mrb[0].mxu0
  %v151 = vpop.f32.mrb[0].mxu0
  %v152 = vadd.f32 %v41, %v151
  %v153 = vpop.f32.mrb[0].mxu0
  %154 = vmatprep.mubr.bf16.mxu0 0
  %155 = vmatmul.mubr.bf16.gmra.mrb[0].mxu0 %v94
  %v156 = vpop.f32.mrb[0].mxu0
  %v157 = vadd.f32 %v41, %v156
  %v158 = vpop.f32.mrb[0].mxu0
  %v159 = vpop.f32.mrb[0].mxu0
  %v160 = vadd.f32 %v41, %v159
  %v161 = vpop.f32.mrb[0].mxu0
  %162 = vmatprep.mubr.bf16.mxu0 0
  %163 = vmatmul.mubr.bf16.gmra.mrb[0].mxu0 %v97
  %v164 = vpop.f32.mrb[0].mxu0
  %v165 = vadd.f32 %v41, %v164
  %v166 = vpop.f32.mrb[0].mxu0
  %v167 = vpop.f32.mrb[0].mxu0
  %v168 = vadd.f32 %v41, %v167
  %v169 = vpop.f32.mrb[0].mxu0
  %170 = vmatprep.mubr.bf16.mxu0 0
  %171 = vmatmul.mubr.bf16.gmra.mrb[0].mxu0 %v100
  %v172 = vpop.f32.mrb[0].mxu0
  %v173 = vadd.f32 %v41, %v172
  %v174 = vpop.f32.mrb[0].mxu0
  %v175 = vpop.f32.mrb[0].mxu0
  %v176 = vadd.f32 %v41, %v175
  %v177 = vpop.f32.mrb[0].mxu0
  %178 = vmatprep.mubr.bf16.mxu0 0
  %179 = vmatmul.mubr.bf16.gmra.mrb[0].mxu0 %v103
  %v180 = vpop.f32.mrb[0].mxu0
  %v181 = vadd.f32 %v41, %v180
  %v182 = vpop.f32.mrb[0].mxu0
  %v183 = vpop.f32.mrb[0].mxu0
  %v184 = vadd.f32 %v41, %v183
  %v185 = vpop.f32.mrb[0].mxu0
  %186 = vmatprep.mubr.bf16.mxu0 0
  %187 = vmatmul.mubr.bf16.gmra.mrb[0].mxu0 %v106
  %v188 = vpop.f32.mrb[0].mxu0
  %v189 = vadd.f32 %v41, %v188
  %v190 = vpop.f32.mrb[0].mxu0
  %v191 = vpop.f32.mrb[0].mxu0
  %v192 = vadd.f32 %v41, %v191
  %v193 = vpop.f32.mrb[0].mxu0
  %194 = vmatprep.mubr.bf16.mxu0 0
  %195 = vmatmul.mubr.bf16.gmra.mrb[0].mxu0 %v109
  %v196 = vpop.f32.mrb[0].mxu0
  %v197 = vadd.f32 %v41, %v196
  %v198 = vpop.f32.mrb[0].mxu0
  %v199 = vpop.f32.mrb[0].mxu0
  %v200 = vadd.f32 %v41, %v199
  %v201 = vpop.f32.mrb[0].mxu0
  %202 = vmatprep.mubr.bf16.mxu0 0
  %203 = vmatmul.mubr.bf16.gmra.mrb[0].mxu0 %v112
  %v204 = vpop.f32.mrb[0].mxu0
  %v205 = vadd.f32 %v41, %v204
  %v206 = vpop.f32.mrb[0].mxu0
  %v207 = vpop.f32.mrb[0].mxu0
  %v208 = vadd.f32 %v41, %v207
  %v209 = vpop.f32.mrb[0].mxu0
  %210 = vdwg.mxu0
  %v211 = vld [vmem:[%s3] sm:$0xff]
  %v212 = vld [vmem:[%s3 + $0x8] sm:$0xff]
  %v213 = vld [vmem:[%s3 + $0x10] sm:$0xff]
  %v214 = vld [vmem:[%s3 + $0x18] sm:$0xff]
  %v215 = vld [vmem:[%s3 + $0x20] sm:$0xff]
  %v216 = vld [vmem:[%s3 + $0x28] sm:$0xff]
  %v217 = vld [vmem:[%s3 + $0x30] sm:$0xff]
  %v218 = vld [vmem:[%s3 + $0x38] sm:$0xff]
  %v219 = vadd.f32 %v149, %v211
  %v220 = vadd.f32 %v152, %v212
  %v221 = vadd.f32 %v157, %v213
  %v222 = vadd.f32 %v160, %v214
  %v223 = vadd.f32 %v165, %v215
  %v224 = vadd.f32 %v168, %v216
  %v225 = vadd.f32 %v173, %v217
  %v226 = vadd.f32 %v176, %v218
  %v227 = vadd.f32 %v181, %v211
  %v228 = vadd.f32 %v184, %v212
  %v229 = vadd.f32 %v189, %v213
  %v230 = vadd.f32 %v192, %v214
  %v231 = vadd.f32 %v197, %v215
  %v232 = vadd.f32 %v200, %v216
  %v233 = vadd.f32 %v205, %v217
  %v234 = vadd.f32 %v208, %v218
  %vm235 = vcmask 261120
  %236 = vst.msk [vmem:[%s4] sm:$0xff] %vm235, %v219
  %237 = vst.msk [vmem:[%s4 + $0x8] sm:$0xff] %vm235, %v220
  %238 = vst.msk [vmem:[%s4 + $0x10] sm:$0xff] %vm235, %v221
  %239 = vst.msk [vmem:[%s4 + $0x18] sm:$0xff] %vm235, %v222
  %240 = vst.msk [vmem:[%s4 + $0x20] sm:$0xff] %vm235, %v223
  %241 = vst.msk [vmem:[%s4 + $0x28] sm:$0xff] %vm235, %v224
  %242 = vst.msk [vmem:[%s4 + $0x30] sm:$0xff] %vm235, %v225
  %243 = vst.msk [vmem:[%s4 + $0x38] sm:$0xff] %vm235, %v226
  %244 = vst.msk [vmem:[%s4 + $0x40] sm:$0xff] %vm235, %v227
  %245 = vst.msk [vmem:[%s4 + $0x48] sm:$0xff] %vm235, %v228
  %246 = vst.msk [vmem:[%s4 + $0x50] sm:$0xff] %vm235, %v229
  %247 = vst.msk [vmem:[%s4 + $0x58] sm:$0xff] %vm235, %v230
  %248 = vst.msk [vmem:[%s4 + $0x60] sm:$0xff] %vm235, %v231
  %249 = vst.msk [vmem:[%s4 + $0x68] sm:$0xff] %vm235, %v232
  %250 = vst.msk [vmem:[%s4 + $0x70] sm:$0xff] %vm235, %v233
  %251 = vst.msk [vmem:[%s4 + $0x78] sm:$0xff] %vm235, %v234
  // Predicated region
  $region18: #{tpu_custom_call.1} parent=0 // pred_check
    _
  $region19: #{tpu_custom_call.1} parent=0 // pred_check_branch
    %253 = sbr.rel (0) target = $region21
  $region20: #{tpu_custom_call.1} parent=0 // pred_region
    _
  $region21: #{tpu_custom_call.1} parent=0 // pred_fallthru
    _
  // Predicated region
  $region22: #{tpu_custom_call.1} parent=0 // pred_check
    _
  $region23: #{tpu_custom_call.1} parent=0 // pred_check_branch
    %255 = sbr.rel (0) target = $region25
  $region24: #{tpu_custom_call.1} parent=0 // pred_region
    _
  $region25: #{tpu_custom_call.1} parent=0 // pred_fallthru
    _

</llo_original>
